<compile_context>
chip_gen: v7x
topology: tpu7x:2x2x1
jax: 0.10.0
libtpu: 0.0.40
codegen_flags: <defaults>
</compile_context>

<pallas_src>
import functools

import jax
import jax.numpy as jnp
import numpy as np
from jax import lax
from jax.experimental import pallas as pl
from jax.experimental.pallas import tpu as pltpu

_EPS = 1e-8
_NEG = -1e30


def _dtw_crossing_kernel(len1_ref, len2_ref, ab_ref, e1_ref, e2_ref, o_ref, *,
                         unroll):
    # len1_ref/len2_ref: SMEM int32[B_pad] scalar-prefetch (attention_mask sums)
    # ab_ref:            SMEM f32[2] learnable scalars a, b
    # e1_ref/e2_ref:     VMEM bf16 (G, S, D) token embeddings for G pairs
    # o_ref:             VMEM f32 (G, 128) lane-dense score block
    G, S, D = e1_ref.shape
    a_s = ab_ref[0]
    b_s = ab_ref[1]
    base = pl.program_id(0) * G

    # Hoisted loop-invariant constants (JAX does not CSE broadcast_in_dim).
    row_iota = lax.broadcasted_iota(jnp.int32, (S, 1), 0)     # sentence-1 axis
    col_iota = lax.broadcasted_iota(jnp.int32, (1, S), 1)     # sentence-2 axis
    out_sub = lax.broadcasted_iota(jnp.int32, o_ref.shape, 0)
    ones_rows = jnp.ones((8, D), jnp.float32)   # reduce-via-MXU lhs (row 0 used)

    def body(g, acc):
        l1 = len1_ref[base + g]             # valid tokens incl. [CLS]/[SEP]
        l2 = len2_ref[base + g]
        L1 = jnp.maximum(l1 - 2, 0)         # real tokens after [1:-1] slice
        L2 = jnp.maximum(l2 - 2, 0)

        x1 = e1_ref[g]                      # (S, D) bf16
        x2 = e2_ref[g]                      # (S, D) bf16

        # Un-normalized token gram matrix: bf16 operands straight off the DMA
        # tiles into the MXU, f32 accumulation.  Contraction on dim 1 of both
        # operands -- no transpose of either operand.
        raw = lax.dot_general(
            x1, x2,
            dimension_numbers=(((1,), (1,)), ((), ())),
            preferred_element_type=jnp.float32)                       # (S, S)

        # Squared norms in f32.  Row side (S,1) via lane reduce; column side
        # produced directly in (1,S) orientation by contracting with a ones
        # vector on the MXU (avoids an XLU transpose, offloads the reduce).
        x1f = x1.astype(jnp.float32)
        x2f = x2.astype(jnp.float32)
        n1 = jnp.sum(x1f * x1f, axis=1, keepdims=True)                # (S, 1)
        n2 = lax.dot_general(
            ones_rows, x2f * x2f,
            dimension_numbers=(((1,), (1,)), ((), ())),
            preferred_element_type=jnp.float32)[0:1, :]               # (1, S)
        inv1 = lax.rsqrt(jnp.maximum(n1, _EPS * _EPS))                # 1/max(|x|,eps)
        inv2 = lax.rsqrt(jnp.maximum(n2, _EPS * _EPS))

        # z' = a * cos(x1_i, x2_j); the +b and the tanh are deferred until
        # after the masked max (tanh monotone, b constant -> exact).
        z = raw * (a_s * inv1) * inv2                                  # (S, S)

        # Valid tokens are positions 1 .. len-2 (contiguous-prefix BERT masks).
        valid_r = (row_iota >= 1) & (row_iota < l1 - 1)                # (S, 1)
        valid_c = (col_iota >= 1) & (col_iota < l2 - 1)                # (1, S)
        masked = jnp.where(valid_r & valid_c, z, _NEG)

        def s1_longer():
            # max over sentence-1 (rows), tanh on (1,S) only, mean over cols
            cm = jnp.tanh(jnp.max(masked, axis=0, keepdims=True) + b_s)
            return (jnp.sum(jnp.where(valid_c, cm, 0.0))
                    / jnp.maximum(L2.astype(jnp.float32), 1.0))

        def s2_longer():
            # max over sentence-2 (cols), tanh on (S,1) only, mean over rows
            rm = jnp.tanh(jnp.max(masked, axis=1, keepdims=True) + b_s)
            return (jnp.sum(jnp.where(valid_r, rm, 0.0))
                    / jnp.maximum(L1.astype(jnp.float32), 1.0))

        # Only the needed reduction direction runs (ties -> s1_longer, matching
        # the reference which swaps only when len(s1) < len(s2)).
        score = lax.cond(L1 >= L2, s1_longer, s2_longer)
        return jnp.where(out_sub == g, score, acc)

    # fori_loop bounds the live range of the per-pair (S,S)/(S,D) f32 temps to
    # one iteration; unroll only when the whole footprint is tiny.
    acc = lax.fori_loop(0, G, body, jnp.zeros(o_ref.shape, jnp.float32),
                        unroll=unroll)
    o_ref[...] = acc


def dtw_crossing_scores(emb1, emb2, attention_mask_1, attention_mask_2, a, b,
                        pairs_per_block=8):
    """Pallas equivalent of DTW.forward (crossing=True), given BERT outputs.

    emb1/emb2: [B, S, D] float token embeddings (stand-in for bert_model(...)[0])
    attention_mask_*: [B, S] int {0,1}, contiguous-prefix masks incl. [CLS]/[SEP]
    a, b: shape-(1,) learnable scalars.
    Returns: [B] float32 similarity scores (== torch.cat(sim_scores)).
    """
    B, S, D = emb1.shape

    len1 = jnp.sum(attention_mask_1, axis=1).astype(jnp.int32)
    len2 = jnp.sum(attention_mask_2, axis=1).astype(jnp.int32)

    # Trim the sequence axis to the longest real sentence (rounded up to the
    # bf16 sublane tile of 16) when the masks are statically known: DMA bytes,
    # the (S,S) elementwise work and the reductions all scale with S / S^2.
    S_eff = S
    try:
        max_len = max(int(jnp.max(len1)), int(jnp.max(len2)))
        S_eff = min(S, max(16, -(-max_len // 16) * 16))
    except Exception:            # masks are tracers (under jit): keep static S
        S_eff = S
    if S_eff != S:
        emb1 = emb1[:, :S_eff, :]
        emb2 = emb2[:, :S_eff, :]

    # Pairs per grid step: amortizes per-step pipeline overhead; output block
    # (G, 128) must satisfy the (8, 128) tiling rule (G multiple of 8, or the
    # full batch dim when B <= pairs_per_block).
    if B <= pairs_per_block:
        G = B
    else:
        G = pairs_per_block
        assert G % 8 == 0, \
            "pairs_per_block must be a multiple of 8 when B > pairs_per_block"
    B_pad = ((B + G - 1) // G) * G

    # bf16 halves HBM traffic / VMEM footprint; MXU takes bf16 natively.
    e1 = emb1.astype(jnp.bfloat16)
    e2 = emb2.astype(jnp.bfloat16)
    if B_pad != B:
        pad = B_pad - B
        e1 = jnp.pad(e1, ((0, pad), (0, 0), (0, 0)))
        e2 = jnp.pad(e2, ((0, pad), (0, 0), (0, 0)))
        len1 = jnp.pad(len1, (0, pad))
        len2 = jnp.pad(len2, (0, pad))

    ab = jnp.concatenate([a, b]).astype(jnp.float32)    # f32[2] -> SMEM

    # Unroll the per-pair loop only when all G pairs' temporaries stay small.
    per_pair_tmp = 2 * (S_eff * S_eff * 4) + 3 * (S_eff * D * 4)
    unroll = (G * per_pair_tmp) <= (2 << 20)

    # VMEM budget: double-buffered bf16 input blocks + output + f32 temps,
    # clamped to ~90% of this chip's physical VMEM (64 MiB on v7x).
    in_bytes = 2 * 2 * G * S_eff * D * 2
    out_bytes = 2 * G * 128 * 4
    tmp_bytes = per_pair_tmp * (G if unroll else 2)
    budget = in_bytes + out_bytes + tmp_bytes + (8 << 20)
    try:
        vmem_cap = pltpu.get_tpu_info().vmem_capacity_bytes
    except Exception:
        vmem_cap = 64 << 20
    vmem_limit = int(min(max(budget, 32 << 20), int(vmem_cap * 0.9)))

    kernel = functools.partial(_dtw_crossing_kernel, unroll=unroll)

    out = pl.pallas_call(
        kernel,
        out_shape=jax.ShapeDtypeStruct((B_pad, 128), jnp.float32),
        grid_spec=pltpu.PrefetchScalarGridSpec(
            num_scalar_prefetch=2,                       # len1, len2 -> SMEM
            grid=(B_pad // G,),
            in_specs=[
                pl.BlockSpec(memory_space=pltpu.MemorySpace.SMEM),        # a, b
                pl.BlockSpec((G, S_eff, D), lambda i, l1, l2: (i, 0, 0)),  # emb1
                pl.BlockSpec((G, S_eff, D), lambda i, l1, l2: (i, 0, 0)),  # emb2
            ],
            out_specs=pl.BlockSpec((G, 128), lambda i, l1, l2: (i, 0)),
        ),
        compiler_params=pltpu.CompilerParams(
            dimension_semantics=("parallel",),           # shard across TCs (v7x)
            vmem_limit_bytes=vmem_limit),
    )(len1, len2, ab, e1, e2)
    return out[:B, 0]


def _reference(emb1, emb2, mask1, mask2, a, b):
    """Pure numpy transcription of the torch crossing=True path."""
    e1, e2 = np.asarray(emb1), np.asarray(emb2)
    m1, m2 = np.asarray(mask1), np.asarray(mask2)
    av, bv = float(np.asarray(a)[0]), float(np.asarray(b)[0])
    scores = []
    for i in range(e1.shape[0]):
        s1 = e1[i][m1[i] == 1][1:-1]
        s2 = e2[i][m2[i] == 1][1:-1]
        if len(s1) < len(s2):
            s1, s2 = s2, s1
        a_n = np.linalg.norm(s1, axis=1, keepdims=True)
        b_n = np.linalg.norm(s2, axis=1, keepdims=True)
        sim = (s1 / np.maximum(a_n, _EPS)) @ (s2 / np.maximum(b_n, _EPS)).T
        sim = np.tanh(sim * av + bv)
        scores.append(sim.max(axis=0).sum() / sim.shape[1])
    return np.array(scores, dtype=np.float32)


if __name__ == "__main__":
    key = jax.random.PRNGKey(0)
    B, S, D = 3, 24, 32
    k1, k2, k3, k4 = jax.random.split(key, 4)

    # Stand-in for frozen-BERT last_hidden_state of each sentence pair.
    emb1 = jax.random.normal(k1, (B, S, D), dtype=jnp.float32)
    emb2 = jax.random.normal(k2, (B, S, D), dtype=jnp.float32)

    # Contiguous-prefix attention masks (incl. [CLS]/[SEP]); pair 1 exercises
    # the len(s1) < len(s2) swap branch, pair 2 the equal-length tie case.
    len1 = jnp.array([10, 7, 9], dtype=jnp.int32)
    len2 = jnp.array([6, 12, 9], dtype=jnp.int32)
    idx = jnp.arange(S)[None, :]
    attention_mask_1 = (idx < len1[:, None]).astype(jnp.int32)
    attention_mask_2 = (idx < len2[:, None]).astype(jnp.int32)

    # nn.Parameter(torch.rand(1)) -> deterministic uniform [0, 1) scalars.
    a = jax.random.uniform(k3, (1,), dtype=jnp.float32)
    b = jax.random.uniform(k4, (1,), dtype=jnp.float32)

    out = dtw_crossing_scores(emb1, emb2, attention_mask_1, attention_mask_2, a, b)
    out = jax.block_until_ready(out)

    # Reference on the same bf16-rounded embeddings the kernel consumes.
    e1_r = np.asarray(emb1.astype(jnp.bfloat16).astype(jnp.float32))
    e2_r = np.asarray(emb2.astype(jnp.bfloat16).astype(jnp.float32))
    ref = _reference(e1_r, e2_r, attention_mask_1, attention_mask_2, a, b)
    assert out.shape == (B,), out.shape
    assert np.allclose(np.asarray(out), ref, atol=1e-2, rtol=1e-2), (out, ref)
    print("KERNEL_OK")
</pallas_src>

<mosaic_0001>
module attributes {stable_mosaic.version = 11 : i64} {
  func.func @_dtw_crossing_kernel(%arg0: i32, %arg1: memref<3xi32, #tpu.memory_space<smem>>, %arg2: memref<3xi32, #tpu.memory_space<smem>>, %arg3: memref<2xf32, #tpu.memory_space<smem>>, %arg4: memref<3x16x32xbf16, #tpu.memory_space<vmem>>, %arg5: memref<3x16x32xbf16, #tpu.memory_space<vmem>>, %arg6: memref<3x128xf32, #tpu.memory_space<vmem>>) attributes {dimension_semantics = [#tpu.dimension_semantics<parallel>], iteration_bounds = array<i64: 1>, scalar_prefetch = 2 : i64, scratch_operands = 0 : i64, tpu.core_type = #tpu.core_type<tc>, window_params = [{transform_indices = @transform_0, window_bounds = array<i64: 2>}, {transform_indices = @transform_1, window_bounds = array<i64: 3, 16, 32>}, {transform_indices = @transform_2, window_bounds = array<i64: 3, 16, 32>}, {transform_indices = @transform_3, window_bounds = array<i64: 3, 128>}]} {
    %c0 = arith.constant 0 : index
    %0 = memref.load %arg3[%c0] : memref<2xf32, #tpu.memory_space<smem>>
    %c1 = arith.constant 1 : index
    %1 = memref.load %arg3[%c1] : memref<2xf32, #tpu.memory_space<smem>>
    %c3_i32 = arith.constant 3 : i32
    %2 = arith.muli %arg0, %c3_i32 : i32
    %3 = tpu.iota {dimensions = array<i32: 0>} : vector<16x1xi32>
    %4 = tpu.iota {dimensions = array<i32: 1>} : vector<1x16xi32>
    %5 = tpu.iota {dimensions = array<i32: 0>} : vector<3x128xi32>
    %cst = arith.constant 1.000000e+00 : f32
    %6 = vector.broadcast %cst : f32 to vector<8x32xf32>
    %cst_0 = arith.constant 0.000000e+00 : f32
    %7 = vector.broadcast %cst_0 : f32 to vector<3x128xf32>
    %c0_i32 = arith.constant 0 : i32
    %8 = arith.addi %2, %c0_i32 : i32
    %9 = arith.index_cast %8 : i32 to index
    %10 = memref.load %arg1[%9] : memref<3xi32, #tpu.memory_space<smem>>
    %11 = arith.addi %2, %c0_i32 : i32
    %12 = arith.index_cast %11 : i32 to index
    %13 = memref.load %arg2[%12] : memref<3xi32, #tpu.memory_space<smem>>
    %c2_i32 = arith.constant 2 : i32
    %14 = arith.subi %10, %c2_i32 : i32
    %c0_i32_1 = arith.constant 0 : i32
    %15 = arith.maxsi %14, %c0_i32_1 : i32
    %c2_i32_2 = arith.constant 2 : i32
    %16 = arith.subi %13, %c2_i32_2 : i32
    %c0_i32_3 = arith.constant 0 : i32
    %17 = arith.maxsi %16, %c0_i32_3 : i32
    %18 = arith.index_cast %c0_i32 : i32 to index
    %c0_4 = arith.constant 0 : index
    %c0_5 = arith.constant 0 : index
    %19 = vector.load %arg4[%18, %c0_4, %c0_5] : memref<3x16x32xbf16, #tpu.memory_space<vmem>>, vector<1x16x32xbf16>
    %20 = vector.shape_cast %19 : vector<1x16x32xbf16> to vector<16x32xbf16>
    %21 = arith.index_cast %c0_i32 : i32 to index
    %c0_6 = arith.constant 0 : index
    %c0_7 = arith.constant 0 : index
    %22 = vector.load %arg5[%21, %c0_6, %c0_7] : memref<3x16x32xbf16, #tpu.memory_space<vmem>>, vector<1x16x32xbf16>
    %23 = vector.shape_cast %22 : vector<1x16x32xbf16> to vector<16x32xbf16>
    %cst_8 = arith.constant dense<0.000000e+00> : vector<16x16xf32>
    %24 = tpu.matmul %20, %23, %cst_8 {dimension_numbers = #tpu.dot_dimension_numbers<[1], [1], [0], [0], [0, 0, 1, 0], [], []>} : vector<16x32xbf16>, vector<16x32xbf16>, vector<16x16xf32> -> vector<16x16xf32>
    %25 = arith.extf %20 : vector<16x32xbf16> to vector<16x32xf32>
    %26 = arith.extf %23 : vector<16x32xbf16> to vector<16x32xf32>
    %27 = arith.mulf %25, %25 : vector<16x32xf32>
    %cst_9 = arith.constant dense<0.000000e+00> : vector<16xf32>
    %28 = vector.multi_reduction <add>, %27, %cst_9 [1] : vector<16x32xf32> to vector<16xf32>
    %29 = vector.shape_cast %28 : vector<16xf32> to vector<16x1xf32>
    %30 = arith.mulf %26, %26 : vector<16x32xf32>
    %cst_10 = arith.constant dense<0.000000e+00> : vector<8x16xf32>
    %31 = tpu.matmul %6, %30, %cst_10 {dimension_numbers = #tpu.dot_dimension_numbers<[1], [1], [0], [0], [0, 0, 1, 0], [], []>} : vector<8x32xf32>, vector<16x32xf32>, vector<8x16xf32> -> vector<8x16xf32>
    %32 = vector.extract_strided_slice %31 {offsets = [0, 0], sizes = [1, 16], strides = [1, 1]} : vector<8x16xf32> to vector<1x16xf32>
    %cst_11 = arith.constant 1.000000e-16 : f32
    %33 = vector.broadcast %cst_11 : f32 to vector<16x1xf32>
    %34 = arith.maximumf %29, %33 : vector<16x1xf32>
    %35 = math.rsqrt %34 : vector<16x1xf32>
    %cst_12 = arith.constant 1.000000e-16 : f32
    %36 = vector.broadcast %cst_12 : f32 to vector<1x16xf32>
    %37 = arith.maximumf %32, %36 : vector<1x16xf32>
    %38 = math.rsqrt %37 : vector<1x16xf32>
    %39 = vector.broadcast %0 : f32 to vector<16x1xf32>
    %40 = arith.mulf %39, %35 : vector<16x1xf32>
    %41 = vector.broadcast %40 : vector<16x1xf32> to vector<16x16xf32>
    %42 = arith.mulf %24, %41 : vector<16x16xf32>
    %43 = vector.broadcast %38 : vector<1x16xf32> to vector<16x16xf32>
    %44 = arith.mulf %42, %43 : vector<16x16xf32>
    %c1_i32 = arith.constant 1 : i32
    %45 = vector.broadcast %c1_i32 : i32 to vector<16x1xi32>
    %46 = arith.cmpi sge, %3, %45 : vector<16x1xi32>
    %c1_i32_13 = arith.constant 1 : i32
    %47 = arith.subi %10, %c1_i32_13 : i32
    %48 = vector.broadcast %47 : i32 to vector<16x1xi32>
    %49 = arith.cmpi slt, %3, %48 : vector<16x1xi32>
    %50 = arith.andi %46, %49 : vector<16x1xi1>
    %c1_i32_14 = arith.constant 1 : i32
    %51 = vector.broadcast %c1_i32_14 : i32 to vector<1x16xi32>
    %52 = arith.cmpi sge, %4, %51 : vector<1x16xi32>
    %c1_i32_15 = arith.constant 1 : i32
    %53 = arith.subi %13, %c1_i32_15 : i32
    %54 = vector.broadcast %53 : i32 to vector<1x16xi32>
    %55 = arith.cmpi slt, %4, %54 : vector<1x16xi32>
    %56 = arith.andi %52, %55 : vector<1x16xi1>
    %57 = vector.broadcast %50 : vector<16x1xi1> to vector<16x16xi1>
    %58 = vector.broadcast %56 : vector<1x16xi1> to vector<16x16xi1>
    %59 = arith.andi %57, %58 : vector<16x16xi1>
    %cst_16 = arith.constant -1.000000e+30 : f32
    %60 = vector.broadcast %cst_16 : f32 to vector<16x16xf32>
    %61 = arith.select %59, %44, %60 : vector<16x16xi1>, vector<16x16xf32>
    %62 = arith.cmpi sge, %15, %17 : i32
    %63 = arith.extui %62 : i1 to i32
    %c0_i32_17 = arith.constant 0 : i32
    %64 = arith.cmpi ne, %63, %c0_i32_17 : i32
    %65 = scf.if %64 -> (f32) {
      %cst_61 = arith.constant dense<0xFF800000> : vector<16xf32>
      %195 = vector.multi_reduction <maximumf>, %61, %cst_61 [0] : vector<16x16xf32> to vector<16xf32>
      %196 = vector.shape_cast %195 : vector<16xf32> to vector<1x16xf32>
      %197 = vector.broadcast %1 : f32 to vector<1x16xf32>
      %198 = arith.addf %196, %197 : vector<1x16xf32>
      %199 = math.tanh %198 : vector<1x16xf32>
      %cst_62 = arith.constant 0.000000e+00 : f32
      %200 = vector.broadcast %cst_62 : f32 to vector<1x16xf32>
      %201 = arith.select %56, %199, %200 : vector<1x16xi1>, vector<1x16xf32>
      %202 = vector.shape_cast %201 : vector<1x16xf32> to vector<1x1x16xf32>
      %cst_63 = arith.constant dense<0.000000e+00> : vector<1xf32>
      %203 = vector.multi_reduction <add>, %202, %cst_63 [1, 2] : vector<1x1x16xf32> to vector<1xf32>
      %204 = vector.shape_cast %203 : vector<1xf32> to vector<1x1x1xf32>
      %205 = vector.extract %204[0, 0, 0] : f32 from vector<1x1x1xf32>
      %206 = arith.sitofp %17 : i32 to f32
      %cst_64 = arith.constant 1.000000e+00 : f32
      %207 = arith.maximumf %206, %cst_64 : f32
      %208 = arith.divf %205, %207 : f32
      scf.yield %208 : f32
    } else {
      %cst_61 = arith.constant dense<0xFF800000> : vector<16xf32>
      %195 = vector.multi_reduction <maximumf>, %61, %cst_61 [1] : vector<16x16xf32> to vector<16xf32>
      %196 = vector.shape_cast %195 : vector<16xf32> to vector<16x1xf32>
      %197 = vector.broadcast %1 : f32 to vector<16x1xf32>
      %198 = arith.addf %196, %197 : vector<16x1xf32>
      %199 = math.tanh %198 : vector<16x1xf32>
      %cst_62 = arith.constant 0.000000e+00 : f32
      %200 = vector.broadcast %cst_62 : f32 to vector<16x1xf32>
      %201 = arith.select %50, %199, %200 : vector<16x1xi1>, vector<16x1xf32>
      %202 = vector.shape_cast %201 : vector<16x1xf32> to vector<1x16x1xf32>
      %cst_63 = arith.constant dense<0.000000e+00> : vector<1xf32>
      %203 = vector.multi_reduction <add>, %202, %cst_63 [1, 2] : vector<1x16x1xf32> to vector<1xf32>
      %204 = vector.shape_cast %203 : vector<1xf32> to vector<1x1x1xf32>
      %205 = vector.extract %204[0, 0, 0] : f32 from vector<1x1x1xf32>
      %206 = arith.sitofp %15 : i32 to f32
      %cst_64 = arith.constant 1.000000e+00 : f32
      %207 = arith.maximumf %206, %cst_64 : f32
      %208 = arith.divf %205, %207 : f32
      scf.yield %208 : f32
    }
    %66 = vector.broadcast %c0_i32 : i32 to vector<3x128xi32>
    %67 = arith.cmpi eq, %5, %66 : vector<3x128xi32>
    %68 = vector.broadcast %65 : f32 to vector<3x128xf32>
    %69 = arith.select %67, %68, %7 : vector<3x128xi1>, vector<3x128xf32>
    %c1_i32_18 = arith.constant 1 : i32
    %70 = arith.addi %2, %c1_i32_18 : i32
    %71 = arith.index_cast %70 : i32 to index
    %72 = memref.load %arg1[%71] : memref<3xi32, #tpu.memory_space<smem>>
    %73 = arith.addi %2, %c1_i32_18 : i32
    %74 = arith.index_cast %73 : i32 to index
    %75 = memref.load %arg2[%74] : memref<3xi32, #tpu.memory_space<smem>>
    %c2_i32_19 = arith.constant 2 : i32
    %76 = arith.subi %72, %c2_i32_19 : i32
    %c0_i32_20 = arith.constant 0 : i32
    %77 = arith.maxsi %76, %c0_i32_20 : i32
    %c2_i32_21 = arith.constant 2 : i32
    %78 = arith.subi %75, %c2_i32_21 : i32
    %c0_i32_22 = arith.constant 0 : i32
    %79 = arith.maxsi %78, %c0_i32_22 : i32
    %80 = arith.index_cast %c1_i32_18 : i32 to index
    %c0_23 = arith.constant 0 : index
    %c0_24 = arith.constant 0 : index
    %81 = vector.load %arg4[%80, %c0_23, %c0_24] : memref<3x16x32xbf16, #tpu.memory_space<vmem>>, vector<1x16x32xbf16>
    %82 = vector.shape_cast %81 : vector<1x16x32xbf16> to vector<16x32xbf16>
    %83 = arith.index_cast %c1_i32_18 : i32 to index
    %c0_25 = arith.constant 0 : index
    %c0_26 = arith.constant 0 : index
    %84 = vector.load %arg5[%83, %c0_25, %c0_26] : memref<3x16x32xbf16, #tpu.memory_space<vmem>>, vector<1x16x32xbf16>
    %85 = vector.shape_cast %84 : vector<1x16x32xbf16> to vector<16x32xbf16>
    %cst_27 = arith.constant dense<0.000000e+00> : vector<16x16xf32>
    %86 = tpu.matmul %82, %85, %cst_27 {dimension_numbers = #tpu.dot_dimension_numbers<[1], [1], [0], [0], [0, 0, 1, 0], [], []>} : vector<16x32xbf16>, vector<16x32xbf16>, vector<16x16xf32> -> vector<16x16xf32>
    %87 = arith.extf %82 : vector<16x32xbf16> to vector<16x32xf32>
    %88 = arith.extf %85 : vector<16x32xbf16> to vector<16x32xf32>
    %89 = arith.mulf %87, %87 : vector<16x32xf32>
    %cst_28 = arith.constant dense<0.000000e+00> : vector<16xf32>
    %90 = vector.multi_reduction <add>, %89, %cst_28 [1] : vector<16x32xf32> to vector<16xf32>
    %91 = vector.shape_cast %90 : vector<16xf32> to vector<16x1xf32>
    %92 = arith.mulf %88, %88 : vector<16x32xf32>
    %cst_29 = arith.constant dense<0.000000e+00> : vector<8x16xf32>
    %93 = tpu.matmul %6, %92, %cst_29 {dimension_numbers = #tpu.dot_dimension_numbers<[1], [1], [0], [0], [0, 0, 1, 0], [], []>} : vector<8x32xf32>, vector<16x32xf32>, vector<8x16xf32> -> vector<8x16xf32>
    %94 = vector.extract_strided_slice %93 {offsets = [0, 0], sizes = [1, 16], strides = [1, 1]} : vector<8x16xf32> to vector<1x16xf32>
    %cst_30 = arith.constant 1.000000e-16 : f32
    %95 = vector.broadcast %cst_30 : f32 to vector<16x1xf32>
    %96 = arith.maximumf %91, %95 : vector<16x1xf32>
    %97 = math.rsqrt %96 : vector<16x1xf32>
    %cst_31 = arith.constant 1.000000e-16 : f32
    %98 = vector.broadcast %cst_31 : f32 to vector<1x16xf32>
    %99 = arith.maximumf %94, %98 : vector<1x16xf32>
    %100 = math.rsqrt %99 : vector<1x16xf32>
    %101 = vector.broadcast %0 : f32 to vector<16x1xf32>
    %102 = arith.mulf %101, %97 : vector<16x1xf32>
    %103 = vector.broadcast %102 : vector<16x1xf32> to vector<16x16xf32>
    %104 = arith.mulf %86, %103 : vector<16x16xf32>
    %105 = vector.broadcast %100 : vector<1x16xf32> to vector<16x16xf32>
    %106 = arith.mulf %104, %105 : vector<16x16xf32>
    %c1_i32_32 = arith.constant 1 : i32
    %107 = vector.broadcast %c1_i32_32 : i32 to vector<16x1xi32>
    %108 = arith.cmpi sge, %3, %107 : vector<16x1xi32>
    %c1_i32_33 = arith.constant 1 : i32
    %109 = arith.subi %72, %c1_i32_33 : i32
    %110 = vector.broadcast %109 : i32 to vector<16x1xi32>
    %111 = arith.cmpi slt, %3, %110 : vector<16x1xi32>
    %112 = arith.andi %108, %111 : vector<16x1xi1>
    %c1_i32_34 = arith.constant 1 : i32
    %113 = vector.broadcast %c1_i32_34 : i32 to vector<1x16xi32>
    %114 = arith.cmpi sge, %4, %113 : vector<1x16xi32>
    %c1_i32_35 = arith.constant 1 : i32
    %115 = arith.subi %75, %c1_i32_35 : i32
    %116 = vector.broadcast %115 : i32 to vector<1x16xi32>
    %117 = arith.cmpi slt, %4, %116 : vector<1x16xi32>
    %118 = arith.andi %114, %117 : vector<1x16xi1>
    %119 = vector.broadcast %112 : vector<16x1xi1> to vector<16x16xi1>
    %120 = vector.broadcast %118 : vector<1x16xi1> to vector<16x16xi1>
    %121 = arith.andi %119, %120 : vector<16x16xi1>
    %cst_36 = arith.constant -1.000000e+30 : f32
    %122 = vector.broadcast %cst_36 : f32 to vector<16x16xf32>
    %123 = arith.select %121, %106, %122 : vector<16x16xi1>, vector<16x16xf32>
    %124 = arith.cmpi sge, %77, %79 : i32
    %125 = arith.extui %124 : i1 to i32
    %c0_i32_37 = arith.constant 0 : i32
    %126 = arith.cmpi ne, %125, %c0_i32_37 : i32
    %127 = scf.if %126 -> (f32) {
      %cst_61 = arith.constant dense<0xFF800000> : vector<16xf32>
      %195 = vector.multi_reduction <maximumf>, %123, %cst_61 [0] : vector<16x16xf32> to vector<16xf32>
      %196 = vector.shape_cast %195 : vector<16xf32> to vector<1x16xf32>
      %197 = vector.broadcast %1 : f32 to vector<1x16xf32>
      %198 = arith.addf %196, %197 : vector<1x16xf32>
      %199 = math.tanh %198 : vector<1x16xf32>
      %cst_62 = arith.constant 0.000000e+00 : f32
      %200 = vector.broadcast %cst_62 : f32 to vector<1x16xf32>
      %201 = arith.select %118, %199, %200 : vector<1x16xi1>, vector<1x16xf32>
      %202 = vector.shape_cast %201 : vector<1x16xf32> to vector<1x1x16xf32>
      %cst_63 = arith.constant dense<0.000000e+00> : vector<1xf32>
      %203 = vector.multi_reduction <add>, %202, %cst_63 [1, 2] : vector<1x1x16xf32> to vector<1xf32>
      %204 = vector.shape_cast %203 : vector<1xf32> to vector<1x1x1xf32>
      %205 = vector.extract %204[0, 0, 0] : f32 from vector<1x1x1xf32>
      %206 = arith.sitofp %79 : i32 to f32
      %cst_64 = arith.constant 1.000000e+00 : f32
      %207 = arith.maximumf %206, %cst_64 : f32
      %208 = arith.divf %205, %207 : f32
      scf.yield %208 : f32
    } else {
      %cst_61 = arith.constant dense<0xFF800000> : vector<16xf32>
      %195 = vector.multi_reduction <maximumf>, %123, %cst_61 [1] : vector<16x16xf32> to vector<16xf32>
      %196 = vector.shape_cast %195 : vector<16xf32> to vector<16x1xf32>
      %197 = vector.broadcast %1 : f32 to vector<16x1xf32>
      %198 = arith.addf %196, %197 : vector<16x1xf32>
      %199 = math.tanh %198 : vector<16x1xf32>
      %cst_62 = arith.constant 0.000000e+00 : f32
      %200 = vector.broadcast %cst_62 : f32 to vector<16x1xf32>
      %201 = arith.select %112, %199, %200 : vector<16x1xi1>, vector<16x1xf32>
      %202 = vector.shape_cast %201 : vector<16x1xf32> to vector<1x16x1xf32>
      %cst_63 = arith.constant dense<0.000000e+00> : vector<1xf32>
      %203 = vector.multi_reduction <add>, %202, %cst_63 [1, 2] : vector<1x16x1xf32> to vector<1xf32>
      %204 = vector.shape_cast %203 : vector<1xf32> to vector<1x1x1xf32>
      %205 = vector.extract %204[0, 0, 0] : f32 from vector<1x1x1xf32>
      %206 = arith.sitofp %77 : i32 to f32
      %cst_64 = arith.constant 1.000000e+00 : f32
      %207 = arith.maximumf %206, %cst_64 : f32
      %208 = arith.divf %205, %207 : f32
      scf.yield %208 : f32
    }
    %128 = vector.broadcast %c1_i32_18 : i32 to vector<3x128xi32>
    %129 = arith.cmpi eq, %5, %128 : vector<3x128xi32>
    %130 = vector.broadcast %127 : f32 to vector<3x128xf32>
    %131 = arith.select %129, %130, %69 : vector<3x128xi1>, vector<3x128xf32>
    %c2_i32_38 = arith.constant 2 : i32
    %132 = arith.addi %2, %c2_i32_38 : i32
    %133 = arith.index_cast %132 : i32 to index
    %134 = memref.load %arg1[%133] : memref<3xi32, #tpu.memory_space<smem>>
    %135 = arith.addi %2, %c2_i32_38 : i32
    %136 = arith.index_cast %135 : i32 to index
    %137 = memref.load %arg2[%136] : memref<3xi32, #tpu.memory_space<smem>>
    %c2_i32_39 = arith.constant 2 : i32
    %138 = arith.subi %134, %c2_i32_39 : i32
    %c0_i32_40 = arith.constant 0 : i32
    %139 = arith.maxsi %138, %c0_i32_40 : i32
    %c2_i32_41 = arith.constant 2 : i32
    %140 = arith.subi %137, %c2_i32_41 : i32
    %c0_i32_42 = arith.constant 0 : i32
    %141 = arith.maxsi %140, %c0_i32_42 : i32
    %142 = arith.index_cast %c2_i32_38 : i32 to index
    %c0_43 = arith.constant 0 : index
    %c0_44 = arith.constant 0 : index
    %143 = vector.load %arg4[%142, %c0_43, %c0_44] : memref<3x16x32xbf16, #tpu.memory_space<vmem>>, vector<1x16x32xbf16>
    %144 = vector.shape_cast %143 : vector<1x16x32xbf16> to vector<16x32xbf16>
    %145 = arith.index_cast %c2_i32_38 : i32 to index
    %c0_45 = arith.constant 0 : index
    %c0_46 = arith.constant 0 : index
    %146 = vector.load %arg5[%145, %c0_45, %c0_46] : memref<3x16x32xbf16, #tpu.memory_space<vmem>>, vector<1x16x32xbf16>
    %147 = vector.shape_cast %146 : vector<1x16x32xbf16> to vector<16x32xbf16>
    %cst_47 = arith.constant dense<0.000000e+00> : vector<16x16xf32>
    %148 = tpu.matmul %144, %147, %cst_47 {dimension_numbers = #tpu.dot_dimension_numbers<[1], [1], [0], [0], [0, 0, 1, 0], [], []>} : vector<16x32xbf16>, vector<16x32xbf16>, vector<16x16xf32> -> vector<16x16xf32>
    %149 = arith.extf %144 : vector<16x32xbf16> to vector<16x32xf32>
    %150 = arith.extf %147 : vector<16x32xbf16> to vector<16x32xf32>
    %151 = arith.mulf %149, %149 : vector<16x32xf32>
    %cst_48 = arith.constant dense<0.000000e+00> : vector<16xf32>
    %152 = vector.multi_reduction <add>, %151, %cst_48 [1] : vector<16x32xf32> to vector<16xf32>
    %153 = vector.shape_cast %152 : vector<16xf32> to vector<16x1xf32>
    %154 = arith.mulf %150, %150 : vector<16x32xf32>
    %cst_49 = arith.constant dense<0.000000e+00> : vector<8x16xf32>
    %155 = tpu.matmul %6, %154, %cst_49 {dimension_numbers = #tpu.dot_dimension_numbers<[1], [1], [0], [0], [0, 0, 1, 0], [], []>} : vector<8x32xf32>, vector<16x32xf32>, vector<8x16xf32> -> vector<8x16xf32>
    %156 = vector.extract_strided_slice %155 {offsets = [0, 0], sizes = [1, 16], strides = [1, 1]} : vector<8x16xf32> to vector<1x16xf32>
    %cst_50 = arith.constant 1.000000e-16 : f32
    %157 = vector.broadcast %cst_50 : f32 to vector<16x1xf32>
    %158 = arith.maximumf %153, %157 : vector<16x1xf32>
    %159 = math.rsqrt %158 : vector<16x1xf32>
    %cst_51 = arith.constant 1.000000e-16 : f32
    %160 = vector.broadcast %cst_51 : f32 to vector<1x16xf32>
    %161 = arith.maximumf %156, %160 : vector<1x16xf32>
    %162 = math.rsqrt %161 : vector<1x16xf32>
    %163 = vector.broadcast %0 : f32 to vector<16x1xf32>
    %164 = arith.mulf %163, %159 : vector<16x1xf32>
    %165 = vector.broadcast %164 : vector<16x1xf32> to vector<16x16xf32>
    %166 = arith.mulf %148, %165 : vector<16x16xf32>
    %167 = vector.broadcast %162 : vector<1x16xf32> to vector<16x16xf32>
    %168 = arith.mulf %166, %167 : vector<16x16xf32>
    %c1_i32_52 = arith.constant 1 : i32
    %169 = vector.broadcast %c1_i32_52 : i32 to vector<16x1xi32>
    %170 = arith.cmpi sge, %3, %169 : vector<16x1xi32>
    %c1_i32_53 = arith.constant 1 : i32
    %171 = arith.subi %134, %c1_i32_53 : i32
    %172 = vector.broadcast %171 : i32 to vector<16x1xi32>
    %173 = arith.cmpi slt, %3, %172 : vector<16x1xi32>
    %174 = arith.andi %170, %173 : vector<16x1xi1>
    %c1_i32_54 = arith.constant 1 : i32
    %175 = vector.broadcast %c1_i32_54 : i32 to vector<1x16xi32>
    %176 = arith.cmpi sge, %4, %175 : vector<1x16xi32>
    %c1_i32_55 = arith.constant 1 : i32
    %177 = arith.subi %137, %c1_i32_55 : i32
    %178 = vector.broadcast %177 : i32 to vector<1x16xi32>
    %179 = arith.cmpi slt, %4, %178 : vector<1x16xi32>
    %180 = arith.andi %176, %179 : vector<1x16xi1>
    %181 = vector.broadcast %174 : vector<16x1xi1> to vector<16x16xi1>
    %182 = vector.broadcast %180 : vector<1x16xi1> to vector<16x16xi1>
    %183 = arith.andi %181, %182 : vector<16x16xi1>
    %cst_56 = arith.constant -1.000000e+30 : f32
    %184 = vector.broadcast %cst_56 : f32 to vector<16x16xf32>
    %185 = arith.select %183, %168, %184 : vector<16x16xi1>, vector<16x16xf32>
    %186 = arith.cmpi sge, %139, %141 : i32
    %187 = arith.extui %186 : i1 to i32
    %c0_i32_57 = arith.constant 0 : i32
    %188 = arith.cmpi ne, %187, %c0_i32_57 : i32
    %189 = scf.if %188 -> (f32) {
      %cst_61 = arith.constant dense<0xFF800000> : vector<16xf32>
      %195 = vector.multi_reduction <maximumf>, %185, %cst_61 [0] : vector<16x16xf32> to vector<16xf32>
      %196 = vector.shape_cast %195 : vector<16xf32> to vector<1x16xf32>
      %197 = vector.broadcast %1 : f32 to vector<1x16xf32>
      %198 = arith.addf %196, %197 : vector<1x16xf32>
      %199 = math.tanh %198 : vector<1x16xf32>
      %cst_62 = arith.constant 0.000000e+00 : f32
      %200 = vector.broadcast %cst_62 : f32 to vector<1x16xf32>
      %201 = arith.select %180, %199, %200 : vector<1x16xi1>, vector<1x16xf32>
      %202 = vector.shape_cast %201 : vector<1x16xf32> to vector<1x1x16xf32>
      %cst_63 = arith.constant dense<0.000000e+00> : vector<1xf32>
      %203 = vector.multi_reduction <add>, %202, %cst_63 [1, 2] : vector<1x1x16xf32> to vector<1xf32>
      %204 = vector.shape_cast %203 : vector<1xf32> to vector<1x1x1xf32>
      %205 = vector.extract %204[0, 0, 0] : f32 from vector<1x1x1xf32>
      %206 = arith.sitofp %141 : i32 to f32
      %cst_64 = arith.constant 1.000000e+00 : f32
      %207 = arith.maximumf %206, %cst_64 : f32
      %208 = arith.divf %205, %207 : f32
      scf.yield %208 : f32
    } else {
      %cst_61 = arith.constant dense<0xFF800000> : vector<16xf32>
      %195 = vector.multi_reduction <maximumf>, %185, %cst_61 [1] : vector<16x16xf32> to vector<16xf32>
      %196 = vector.shape_cast %195 : vector<16xf32> to vector<16x1xf32>
      %197 = vector.broadcast %1 : f32 to vector<16x1xf32>
      %198 = arith.addf %196, %197 : vector<16x1xf32>
      %199 = math.tanh %198 : vector<16x1xf32>
      %cst_62 = arith.constant 0.000000e+00 : f32
      %200 = vector.broadcast %cst_62 : f32 to vector<16x1xf32>
      %201 = arith.select %174, %199, %200 : vector<16x1xi1>, vector<16x1xf32>
      %202 = vector.shape_cast %201 : vector<16x1xf32> to vector<1x16x1xf32>
      %cst_63 = arith.constant dense<0.000000e+00> : vector<1xf32>
      %203 = vector.multi_reduction <add>, %202, %cst_63 [1, 2] : vector<1x16x1xf32> to vector<1xf32>
      %204 = vector.shape_cast %203 : vector<1xf32> to vector<1x1x1xf32>
      %205 = vector.extract %204[0, 0, 0] : f32 from vector<1x1x1xf32>
      %206 = arith.sitofp %139 : i32 to f32
      %cst_64 = arith.constant 1.000000e+00 : f32
      %207 = arith.maximumf %206, %cst_64 : f32
      %208 = arith.divf %205, %207 : f32
      scf.yield %208 : f32
    }
    %190 = vector.broadcast %c2_i32_38 : i32 to vector<3x128xi32>
    %191 = arith.cmpi eq, %5, %190 : vector<3x128xi32>
    %192 = vector.broadcast %189 : f32 to vector<3x128xf32>
    %193 = arith.select %191, %192, %131 : vector<3x128xi1>, vector<3x128xf32>
    %c3_i32_58 = arith.constant 3 : i32
    %c0_59 = arith.constant 0 : index
    %c0_60 = arith.constant 0 : index
    %194 = vector.load %arg6[%c0_59, %c0_60] : memref<3x128xf32, #tpu.memory_space<vmem>>, vector<3x128xf32>
    tpu.vector_store %arg6[%c0_59, %c0_60], %193 {strides = array<i32>} : memref<3x128xf32, #tpu.memory_space<vmem>>, vector<3x128xf32>,
    return
  }
  func.func @transform_0(%arg0: i32, %arg1: memref<3xi32, #tpu.memory_space<smem>>, %arg2: memref<3xi32, #tpu.memory_space<smem>>) -> i32 {
    %c0_i32 = arith.constant 0 : i32
    %c0_i32_0 = arith.constant 0 : i32
    return %c0_i32 : i32
  }
  func.func @transform_1(%arg0: i32, %arg1: memref<3xi32, #tpu.memory_space<smem>>, %arg2: memref<3xi32, #tpu.memory_space<smem>>) -> (i32, i32, i32) {
    %c0_i32 = arith.constant 0 : i32
    %c0_i32_0 = arith.constant 0 : i32
    %c0_i32_1 = arith.constant 0 : i32
    return %arg0, %c0_i32, %c0_i32_0 : i32, i32, i32
  }
  func.func @transform_2(%arg0: i32, %arg1: memref<3xi32, #tpu.memory_space<smem>>, %arg2: memref<3xi32, #tpu.memory_space<smem>>) -> (i32, i32, i32) {
    %c0_i32 = arith.constant 0 : i32
    %c0_i32_0 = arith.constant 0 : i32
    %c0_i32_1 = arith.constant 0 : i32
    return %arg0, %c0_i32, %c0_i32_0 : i32, i32, i32
  }
  func.func @transform_3(%arg0: i32, %arg1: memref<3xi32, #tpu.memory_space<smem>>, %arg2: memref<3xi32, #tpu.memory_space<smem>>) -> (i32, i32) {
    %c0_i32 = arith.constant 0 : i32
    %c0_i32_0 = arith.constant 0 : i32
    return %arg0, %c0_i32 : i32, i32
  }
}

</mosaic_0001>

<llo_original>
// kernel: tpu_custom_call.1
$region0: #{tpu_custom_call.1}
  #allocation0 [shape = 'u32[]', space=smem, size = 0x4, offset = 0x4, fixed_abs, tag = 'smem constant byte address 0x4 - core index']
  #allocation1 [shape = 'u32[144,128]{1,0:T(1,128)}', space=vmem, size = 0x12000, scoped, tag = 'internal scratch']
  #allocation2 [shape = 's32[1]{0}', space=sflag, size = 0x4, scoped, tag = 'scoped memory for tpu_custom_call.1']
  #allocation3 [shape = 'u8[512]{0}', space=smem, size = 0x200, scoped, tag = 'prefetched SMEM operand 0']
  #allocation4 [shape = 'u8[512]{0}', space=smem, size = 0x200, scoped, tag = 'prefetched SMEM operand 1']
  %s0 = inlined_call_operand.hbm [shape: s32[3], index: 0, kind: input, shape index: {}]
  %s1 = inlined_call_operand.vmem [shape: s32[3], index: 1, kind: input, shape index: {}]
  %s2 = inlined_call_operand.vmem [shape: f32[2], index: 2, kind: input, shape index: {}]
  %s3 = inlined_call_operand.hbm [shape: bf16[3,16,32], index: 3, kind: input, shape index: {}]
  %s4 = inlined_call_operand.hbm [shape: bf16[3,16,32], index: 4, kind: input, shape index: {}]
  %s5 = inlined_call_operand.hbm [shape: f32[3,128], index: 5, kind: output, shape index: {}]
  %s6 = sld [smem:[#allocation0]]
  $region58: #{tpu_custom_call.1} parent=0
    _
  %s8 = ssub.s32 1, %s6
  %s9 = scalar_select 0, %s8, %s6
  %11 = dma.hbm_to_smem %s0, 16, [#allocation3], [#allocation2]
  %s12 = sshll.u32 %s1, 4
  %s13 = int_to_ptr.vmem [resolvable:$true] %s12
  %15 = dma.vmem_to_smem %s13, 16, [#allocation4], [#allocation2]
  %16 = dma.done [#allocation2], 32
  %17 = sfence
  $region1: #{tpu_custom_call.1} parent=0
    #allocation5 [shape = 'u8[512]{0}', space=smem, size = 0x200, scoped, tag = 'input window, operand 2, single buffered']
    #allocation6 [shape = 's32[1]{0}', space=sflag, size = 0x4, scoped, tag = 'scoped memory for tpu_custom_call.1']
    #allocation7 [shape = 's32[1]{0}', space=sflag, size = 0x4, scoped, tag = 'scoped memory for tpu_custom_call.1']
    #allocation8 [shape = 's32[1]{0}', space=sflag, size = 0x4, scoped, tag = 'scoped memory for tpu_custom_call.1']
    #allocation9 [shape = 'u8[12288]{0}', space=vmem, size = 0x3000, scoped, tag = 'input window, operand 3, single buffered']
    #allocation10 [shape = 'u8[12288]{0}', space=vmem, size = 0x3000, scoped, tag = 'input window, operand 4, single buffered']
    #allocation11 [shape = 's32[1]{0}', space=sflag, size = 0x4, scoped, tag = 'scoped memory for tpu_custom_call.1']
    #allocation12 [shape = 'u8[2048]{0}', space=vmem, size = 0x800, scoped, tag = 'output window, operand 0, single buffered']
    %18 = vsyncpa [#allocation8], 0
    %19 = vsyncpa [#allocation6], 0
    %20 = vsyncpa [#allocation11], 0
    %21 = vsyncpa [#allocation7], 0
    // Predicated region
    $region2: #{tpu_custom_call.1} parent=1 // pred_check
      _
    $region3: #{tpu_custom_call.1} parent=1 // pred_check_branch
      %23 = sbr.rel (0) target = $region5
    $region4: #{tpu_custom_call.1} parent=1 // pred_region
      %s25 = ssub.s32 16, 16
      %26 = vsyncadd [#allocation8], %s25
      %s28 = sshll.u32 %s2, 4
      %s29 = int_to_ptr.vmem [resolvable:$true] %s28
      %31 = dma.vmem_to_smem %s29, 16, [#allocation5], [#allocation8]
    $region5: #{tpu_custom_call.1} parent=1 // pred_fallthru
      _
    // Predicated region
    $region6: #{tpu_custom_call.1} parent=1 // pred_check
      _
    $region7: #{tpu_custom_call.1} parent=1 // pred_check_branch
      %33 = sbr.rel (0) target = $region9
    $region8: #{tpu_custom_call.1} parent=1 // pred_region
      %s35 = ssub.s32 384, 384
      %36 = vsyncadd [#allocation6], %s35
      %s37 = sshll.u32 [#allocation9], 4
      %s38 = int_to_ptr.vmem [resolvable:$true] %s37
      %43 = dma.hbm_to_vmem [thread:$0]  %s3, 384, %s38, [#allocation6], 64, 64, 4
    $region9: #{tpu_custom_call.1} parent=1 // pred_fallthru
      _
    // Predicated region
    $region10: #{tpu_custom_call.1} parent=1 // pred_check
      _
    $region11: #{tpu_custom_call.1} parent=1 // pred_check_branch
      %45 = sbr.rel (0) target = $region13
    $region12: #{tpu_custom_call.1} parent=1 // pred_region
      %s47 = ssub.s32 384, 384
      %48 = vsyncadd [#allocation11], %s47
      %s49 = sshll.u32 [#allocation10], 4
      %s50 = int_to_ptr.vmem [resolvable:$true] %s49
      %55 = dma.hbm_to_vmem [thread:$0]  %s4, 384, %s50, [#allocation11], 64, 64, 4
    $region13: #{tpu_custom_call.1} parent=1 // pred_fallthru
      _
    // Predicated region
    $region14: #{tpu_custom_call.1} parent=1 // pred_check
      _
    $region15: #{tpu_custom_call.1} parent=1 // pred_check_branch
      %57 = sbr.rel (0) target = $region17
    $region16: #{tpu_custom_call.1} parent=1 // pred_region
      %58 = dma.done [#allocation8], 16
    $region17: #{tpu_custom_call.1} parent=1 // pred_fallthru
      _
    // Predicated region
    $region18: #{tpu_custom_call.1} parent=1 // pred_check
      _
    $region19: #{tpu_custom_call.1} parent=1 // pred_check_branch
      %60 = sbr.rel (0) target = $region21
    $region20: #{tpu_custom_call.1} parent=1 // pred_region
      %61 = dma.done [#allocation6], 384
    $region21: #{tpu_custom_call.1} parent=1 // pred_fallthru
      _
    // Predicated region
    $region22: #{tpu_custom_call.1} parent=1 // pred_check
      _
    $region23: #{tpu_custom_call.1} parent=1 // pred_check_branch
      %63 = sbr.rel (0) target = $region25
    $region24: #{tpu_custom_call.1} parent=1 // pred_region
      %64 = dma.done [#allocation11], 384
    $region25: #{tpu_custom_call.1} parent=1 // pred_fallthru
      _
    %65 = sfence
    %s67 = sld [smem:[#allocation5]]
    %s68 = sld [smem:[#allocation5 + $0x1]]
    %s69 = smul.u32 0, 3
    %v70 = vlaneseq
    %v71 = vshrl.u32 %v70, 7
    %v72 = vadd.s32 %v71, 8
    %v73 = vlaneseq
    %v74 = vand.u32 %v73, 127
    %s75 = sld [smem:[#allocation3 + %s69]]
    %s76 = sld [smem:[#allocation4 + %s69]]
    %s77 = ssub.s32 %s75, 2
    %p78 = scmp.gt.s32.totalorder %s77, 0
    %s79 = scalar_select %p78, %s77, 0
    %s80 = ssub.s32 %s76, 2
    %p81 = scmp.gt.s32.totalorder %s80, 0
    %s82 = scalar_select %p81, %s80, 0
    %v83 = vld [vmem:[#allocation9] sm:$0xf]
    %v84 = vld [vmem:[#allocation9 + $0x4] sm:$0xf]
    %v85 = vld [vmem:[#allocation10] sm:$0xf]
    %v86 = vld [vmem:[#allocation10 + $0x4] sm:$0xf]
    %v89 = vunpack.c.l.b16 %v83
    %v90 = vunpack.c.l.b16 %v84
    %v91 = vpack.c.b16 %v90, %v89
    %v94 = vunpack.c.l.b16 %v85
    %v95 = vunpack.c.l.b16 %v86
    %v96 = vpack.c.b16 %v95, %v94
    %vm97 = vcmask 261120
    %v99 = vsel %vm97, %v91, 0
    %v102 = vsel %vm97, %v96, 0
    %104 = vmatprep.subr.bf16.mxu0 0
    %105 = vmatpush1.bf16.xpose.msra.mxu0 %v102
    %106 = vmatprep.subr.bf16.mxu0 0
    %107 = vmatpush1.bf16.xpose.msra.mxu0 0
    %108 = vmatprep.subr.bf16.mxu0 0
    %109 = vmatpush1.bf16.xpose.msra.mxu0 0
    %110 = vmatprep.subr.bf16.mxu0 0
    %111 = vmatpush1.bf16.xpose.msra.mxu0 0
    %112 = vmatprep.subr.bf16.mxu0 0
    %113 = vmatpush1.bf16.xpose.msra.mxu0 0
    %114 = vmatprep.subr.bf16.mxu0 0
    %115 = vmatpush1.bf16.xpose.msra.mxu0 0
    %116 = vmatprep.subr.bf16.mxu0 0
    %117 = vmatpush1.bf16.xpose.msra.mxu0 0
    %118 = vmatprep.subr.bf16.mxu0 0
    %119 = vmatpush1.bf16.xpose.msra.mxu0 0
    %120 = vmatprep.subr.bf16.mxu0 0
    %121 = vmatpush1.bf16.xpose.msra.mxu0 0
    %122 = vmatprep.subr.bf16.mxu0 0
    %123 = vmatpush1.bf16.xpose.msra.mxu0 0
    %124 = vmatprep.subr.bf16.mxu0 0
    %125 = vmatpush1.bf16.xpose.msra.mxu0 0
    %126 = vmatprep.subr.bf16.mxu0 0
    %127 = vmatpush1.bf16.xpose.msra.mxu0 0
    %128 = vmatprep.subr.bf16.mxu0 0
    %129 = vmatpush1.bf16.xpose.msra.mxu0 0
    %130 = vmatprep.subr.bf16.mxu0 0
    %131 = vmatpush1.bf16.xpose.msra.mxu0 0
    %132 = vmatprep.subr.bf16.mxu0 0
    %133 = vmatpush1.bf16.xpose.msra.mxu0 0
    %134 = vmatprep.subr.bf16.mxu0 0
    %135 = vmatpush1.bf16.xpose.msra.mxu0 0
    %136 = vmatprep.mubr.bf16.mxu0 0
    %137 = vmatmul.mubr.bf16.gmra.mrb[0].mxu0 %v99
    %v138 = vpop.f32.mrb[0].mxu0
    %v139 = vadd.f32 0.0, %v138
    %v140 = vpop.f32.mrb[0].mxu0
    %v141 = vpop.f32.mrb[0].mxu0
    %v142 = vadd.f32 0.0, %v141
    %v143 = vpop.f32.mrb[0].mxu0
    %144 = vdwg.mxu0
    %v145 = vunpack.c.l.bf16 %v83
    %v146 = vunpack.c.l.bf16 %v84
    %v147 = vunpack.c.l.bf16 %v85
    %v148 = vunpack.c.l.bf16 %v86
    %v149 = vmul.f32 %v145, %v145
    %v150 = vmul.f32 %v146, %v146
    %v151 = vsel %vm97, %v149, 0.0
    %152 = vadd.xlane.f32.xlu0 %v151
    %v153 = vpop.xlane.xlu0 %152
    %v154 = vsel %vm97, %v150, 0.0
    %155 = vadd.xlane.f32.xlu0 %v154
    %v156 = vpop.xlane.xlu0 %155
    %v157 = vmul.f32 %v147, %v147
    %v158 = vmul.f32 %v148, %v148
    %v160 = vsel %vm97, 1.0, 0
    %v163 = vsel %vm97, %v157, 0
    %v166 = vsel %vm97, %v158, 0
    %168 = vmatprep.subr.mxu0 0.0
    %169 = vmatpush1.xpose.msra.mxu0 %v163
    %170 = vmatprep.subr.mxu0 0.0
    %171 = vmatpush1.xpose.msra.mxu0 %v166
    %172 = vmatprep.subr.mxu0 0.0
    %173 = vmatpush1.xpose.msra.mxu0 0.0
    %174 = vmatprep.subr.mxu0 0.0
    %175 = vmatpush1.xpose.msra.mxu0 0.0
    %176 = vmatprep.subr.mxu0 0.0
    %177 = vmatpush1.xpose.msra.mxu0 0.0
    %178 = vmatprep.subr.mxu0 0.0
    %179 = vmatpush1.xpose.msra.mxu0 0.0
    %180 = vmatprep.subr.mxu0 0.0
    %181 = vmatpush1.xpose.msra.mxu0 0.0
    %182 = vmatprep.subr.mxu0 0.0
    %183 = vmatpush1.xpose.msra.mxu0 0.0
    %184 = vmatprep.subr.mxu0 0.0
    %185 = vmatpush1.xpose.msra.mxu0 0.0
    %186 = vmatprep.subr.mxu0 0.0
    %187 = vmatpush1.xpose.msra.mxu0 0.0
    %188 = vmatprep.subr.mxu0 0.0
    %189 = vmatpush1.xpose.msra.mxu0 0.0
    %190 = vmatprep.subr.mxu0 0.0
    %191 = vmatpush1.xpose.msra.mxu0 0.0
    %192 = vmatprep.subr.mxu0 0.0
    %193 = vmatpush1.xpose.msra.mxu0 0.0
    %194 = vmatprep.subr.mxu0 0.0
    %195 = vmatpush1.xpose.msra.mxu0 0.0
    %196 = vmatprep.subr.mxu0 0.0
    %197 = vmatpush1.xpose.msra.mxu0 0.0
    %198 = vmatprep.subr.mxu0 0.0
    %199 = vmatpush1.xpose.msra.mxu0 0.0
    %200 = vmatprep.subr.mxu0 0.0
    %201 = vmatpush1.xpose.msra.mxu0 0.0
    %202 = vmatprep.subr.mxu0 0.0
    %203 = vmatpush1.xpose.msra.mxu0 0.0
    %204 = vmatprep.subr.mxu0 0.0
    %205 = vmatpush1.xpose.msra.mxu0 0.0
    %206 = vmatprep.subr.mxu0 0.0
    %207 = vmatpush1.xpose.msra.mxu0 0.0
    %208 = vmatprep.subr.mxu0 0.0
    %209 = vmatpush1.xpose.msra.mxu0 0.0
    %210 = vmatprep.subr.mxu0 0.0
    %211 = vmatpush1.xpose.msra.mxu0 0.0
    %212 = vmatprep.subr.mxu0 0.0
    %213 = vmatpush1.xpose.msra.mxu0 0.0
    %214 = vmatprep.subr.mxu0 0.0
    %215 = vmatpush1.xpose.msra.mxu0 0.0
    %216 = vmatprep.subr.mxu0 0.0
    %217 = vmatpush1.xpose.msra.mxu0 0.0
    %218 = vmatprep.subr.mxu0 0.0
    %219 = vmatpush1.xpose.msra.mxu0 0.0
    %220 = vmatprep.subr.mxu0 0.0
    %221 = vmatpush1.xpose.msra.mxu0 0.0
    %222 = vmatprep.subr.mxu0 0.0
    %223 = vmatpush1.xpose.msra.mxu0 0.0
    %224 = vmatprep.subr.mxu0 0.0
    %225 = vmatpush1.xpose.msra.mxu0 0.0
    %226 = vmatprep.subr.mxu0 0.0
    %227 = vmatpush1.xpose.msra.mxu0 0.0
    %228 = vmatprep.subr.mxu0 0.0
    %229 = vmatpush1.xpose.msra.mxu0 0.0
    %230 = vmatprep.subr.mxu0 0.0
    %231 = vmatpush1.xpose.msra.mxu0 0.0
    %232 = vmatprep.mubr.f32.mxu0 0.0
    %233 = vmatmul.mubr.f32.gmra.mrb[0].mxu0 %v160
    %v234 = vpop.f32.mrb[0].mxu0
    %v235 = vadd.f32 0.0, %v234
    %v236 = vpop.f32.mrb[0].mxu0
    %237 = vdwg.mxu0
    %v238 = vmax.f32 %v153, 1e-16
    %v239 = vmax.f32 %v156, 1e-16
    %v240 = vrsqrt.pop %v238
    %v241 = vrsqrt.pop %v239
    %v242 = vmax.f32 %v235, 1e-16
    %v243 = vrsqrt.pop %v242
    %v244 = vstv %s67
    %v245 = vmul.f32 %v244, %v240
    %v246 = vmul.f32 %v244, %v241
    %v247 = vmul.f32 %v139, %v245
    %v248 = vmul.f32 %v142, %v246
    %v249 = vlaneseq
    %v250 = vshrl.u32 %v249, 7
    %v251 = vsub.s32 0, %v250
    %v252 = vrot.slane %v243, %v251
    %v253 = vmul.f32 %v247, %v252
    %v254 = vmul.f32 %v248, %v252
    %vm255 = vcmp.ge.s32.totalorder %v71, 1
    %vm256 = vcmp.ge.s32.totalorder %v72, 1
    %s257 = ssub.s32 %s75, 1
    %v258 = vstv %s257
    %vm259 = vcmp.lt.s32.totalorder %v71, %v258
    %vm260 = vcmp.lt.s32.totalorder %v72, %v258
    %vm261 = vmand %vm255, %vm259
    %vm262 = vmand %vm256, %vm260
    %vm263 = vcmp.ge.s32.totalorder %v74, 1
    %s264 = ssub.s32 %s76, 1
    %v265 = vstv %s264
    %vm266 = vcmp.lt.s32.totalorder %v74, %v265
    %vm267 = vmand %vm263, %vm266
    %v268 = vsel %vm261, 1, 0
    %v269 = vsel %vm262, 1, 0
    %vm270 = vcmp.eq.s32.totalorder %v268, 1
    %vm271 = vcmp.eq.s32.totalorder %v269, 1
    %v272 = vsel %vm267, 1, 0
    %vm273 = vcmp.eq.s32.totalorder %v272, 1
    %vm274 = vmand %vm270, %vm273
    %vm275 = vmand %vm271, %vm273
    %v276 = vsel %vm274, %v253, -1e+30
    %v277 = vsel %vm275, %v254, -1e+30
    %p278 = scmp.ge.s32.totalorder %s79, %s82
    // Predicated region
    $region26: #{tpu_custom_call.1} parent=1 // pred_check
      %p279 = pneg %p278
    $region27: #{tpu_custom_call.1} parent=1 // pred_check_branch
      %281 = sbr.rel (%p279) target = $region29
    $region28: #{tpu_custom_call.1} parent=1 // pred_region
      %vm282 = vcmask 130048
      %v283 = vsel %vm282, %v276, -inf
      %v284 = vsel %vm282, %v277, -inf
      %v285 = vmax.f32 %v283, %v284
      %v286 = vrot.slane %v285, 4
      %v287 = vmax.f32 %v285, %v286
      %v288 = vrot.slane %v287, 2
      %v289 = vmax.f32 %v287, %v288
      %v290 = vrot.slane %v289, 1
      %v291 = vmax.f32 %v289, %v290
      %v292 = vstv %s68
      %v293 = vadd.f32 %v291, %v292
      %v294 = vtanh.pop %v293
      %v295 = vsel %vm267, %v294, 0.0
      %vm296 = vcmask 122880
      %v297 = vsel %vm296, %v295, 0.0
      %298 = vadd.xlane.f32.xlu0 %v297
      %v299 = vpop.xlane.xlu0 %298
      %v300 = vrot.slane %v299, 4
      %v301 = vadd.f32 %v299, %v300
      %v302 = vrot.slane %v301, 2
      %v303 = vadd.f32 %v301, %v302
      %v304 = vrot.slane %v303, 1
      %v305 = vadd.f32 %v303, %v304
      %s306 = vtos %v305
      %s307 = scvt.s32.f32 %s82
      %s308 = smax.f32 %s307, 1.0
      %v309 = vstv %s308
      %v310 = vrcp.pop %v309
      %s311 = vtos %v310
      %s312 = smul.f32 %s306, %s311
    $region29: #{tpu_custom_call.1} parent=1 // pred_fallthru
      %s313 = sphi 0, %s312
    %p314 = pneg %p278
    // Predicated region
    $region30: #{tpu_custom_call.1} parent=1 // pred_check
      _
    $region31: #{tpu_custom_call.1} parent=1 // pred_check_branch
      %316 = sbr.rel (%p278) target = $region33
    $region32: #{tpu_custom_call.1} parent=1 // pred_region
      %vm317 = vcmask 130048
      %v318 = vsel %vm317, %v276, -inf
      %319 = vmax.xlane.f32.xlu0 %v318
      %v320 = vpop.xlane.xlu0 %319
      %v321 = vsel %vm317, %v277, -inf
      %322 = vmax.xlane.f32.xlu0 %v321
      %v323 = vpop.xlane.xlu0 %322
      %v324 = vstv %s68
      %v325 = vadd.f32 %v320, %v324
      %v326 = vadd.f32 %v323, %v324
      %v327 = vtanh.pop %v325
      %v328 = vtanh.pop %v326
      %v329 = vsel %vm261, %v327, 0.0
      %v330 = vsel %vm262, %v328, 0.0
      %vm331 = vcmask 7168
      %v332 = vsel %vm331, %v329, 0.0
      %v333 = vsel %vm331, %v330, 0.0
      %v334 = vadd.f32 %v332, %v333
      %335 = vadd.xlane.f32.xlu0 %v334
      %v336 = vpop.xlane.xlu0 %335
      %v337 = vrot.slane %v336, 4
      %v338 = vadd.f32 %v336, %v337
      %v339 = vrot.slane %v338, 2
      %v340 = vadd.f32 %v338, %v339
      %v341 = vrot.slane %v340, 1
      %v342 = vadd.f32 %v340, %v341
      %s343 = vtos %v342
      %s344 = scvt.s32.f32 %s79
      %s345 = smax.f32 %s344, 1.0
      %v346 = vstv %s345
      %v347 = vrcp.pop %v346
      %s348 = vtos %v347
      %s349 = smul.f32 %s343, %s348
    $region33: #{tpu_custom_call.1} parent=1 // pred_fallthru
      %s350 = sphi %s313, %s349
    %vm351 = vcmp.eq.s32.totalorder %v71, 0
    %v352 = vstv %s350
    %v353 = vsel %vm351, %v352, 0.0
    %s354 = sadd.s32 %s69, 1
    %s355 = sld [smem:[#allocation3 + %s354]]
    %s356 = sld [smem:[#allocation4 + %s354]]
    %s357 = ssub.s32 %s355, 2
    %p358 = scmp.gt.s32.totalorder %s357, 0
    %s359 = scalar_select %p358, %s357, 0
    %s360 = ssub.s32 %s356, 2
    %p361 = scmp.gt.s32.totalorder %s360, 0
    %s362 = scalar_select %p361, %s360, 0
    %s363 = scalar_lea.vmem [#allocation9], 8
    %v364 = vld [vmem:[%s363] sm:$0xf]
    %v365 = vld [vmem:[%s363 + $0x4] sm:$0xf]
    %s366 = scalar_lea.vmem [#allocation10], 8
    %v367 = vld [vmem:[%s366] sm:$0xf]
    %v368 = vld [vmem:[%s366 + $0x4] sm:$0xf]
    %v371 = vunpack.c.l.b16 %v364
    %v372 = vunpack.c.l.b16 %v365
    %v373 = vpack.c.b16 %v372, %v371
    %v376 = vunpack.c.l.b16 %v367
    %v377 = vunpack.c.l.b16 %v368
    %v378 = vpack.c.b16 %v377, %v376
    %v380 = vsel %vm97, %v373, 0
    %v383 = vsel %vm97, %v378, 0
    %385 = vmatprep.subr.bf16.mxu0 0
    %386 = vmatpush1.bf16.xpose.msra.mxu0 %v383
    %387 = vmatprep.subr.bf16.mxu0 0
    %388 = vmatpush1.bf16.xpose.msra.mxu0 0
    %389 = vmatprep.subr.bf16.mxu0 0
    %390 = vmatpush1.bf16.xpose.msra.mxu0 0
    %391 = vmatprep.subr.bf16.mxu0 0
    %392 = vmatpush1.bf16.xpose.msra.mxu0 0
    %393 = vmatprep.subr.bf16.mxu0 0
    %394 = vmatpush1.bf16.xpose.msra.mxu0 0
    %395 = vmatprep.subr.bf16.mxu0 0
    %396 = vmatpush1.bf16.xpose.msra.mxu0 0
    %397 = vmatprep.subr.bf16.mxu0 0
    %398 = vmatpush1.bf16.xpose.msra.mxu0 0
    %399 = vmatprep.subr.bf16.mxu0 0
    %400 = vmatpush1.bf16.xpose.msra.mxu0 0
    %401 = vmatprep.subr.bf16.mxu0 0
    %402 = vmatpush1.bf16.xpose.msra.mxu0 0
    %403 = vmatprep.subr.bf16.mxu0 0
    %404 = vmatpush1.bf16.xpose.msra.mxu0 0
    %405 = vmatprep.subr.bf16.mxu0 0
    %406 = vmatpush1.bf16.xpose.msra.mxu0 0
    %407 = vmatprep.subr.bf16.mxu0 0
    %408 = vmatpush1.bf16.xpose.msra.mxu0 0
    %409 = vmatprep.subr.bf16.mxu0 0
    %410 = vmatpush1.bf16.xpose.msra.mxu0 0
    %411 = vmatprep.subr.bf16.mxu0 0
    %412 = vmatpush1.bf16.xpose.msra.mxu0 0
    %413 = vmatprep.subr.bf16.mxu0 0
    %414 = vmatpush1.bf16.xpose.msra.mxu0 0
    %415 = vmatprep.subr.bf16.mxu0 0
    %416 = vmatpush1.bf16.xpose.msra.mxu0 0
    %417 = vmatprep.mubr.bf16.mxu0 0
    %418 = vmatmul.mubr.bf16.gmra.mrb[0].mxu0 %v380
    %v419 = vpop.f32.mrb[0].mxu0
    %v420 = vadd.f32 0.0, %v419
    %v421 = vpop.f32.mrb[0].mxu0
    %v422 = vpop.f32.mrb[0].mxu0
    %v423 = vadd.f32 0.0, %v422
    %v424 = vpop.f32.mrb[0].mxu0
    %425 = vdwg.mxu0
    %v426 = vunpack.c.l.bf16 %v364
    %v427 = vunpack.c.l.bf16 %v365
    %v428 = vunpack.c.l.bf16 %v367
    %v429 = vunpack.c.l.bf16 %v368
    %v430 = vmul.f32 %v426, %v426
    %v431 = vmul.f32 %v427, %v427
    %v432 = vsel %vm97, %v430, 0.0
    %433 = vadd.xlane.f32.xlu0 %v432
    %v434 = vpop.xlane.xlu0 %433
    %v435 = vsel %vm97, %v431, 0.0
    %436 = vadd.xlane.f32.xlu0 %v435
    %v437 = vpop.xlane.xlu0 %436
    %v438 = vmul.f32 %v428, %v428
    %v439 = vmul.f32 %v429, %v429
    %v441 = vsel %vm97, %v438, 0
    %v444 = vsel %vm97, %v439, 0
    %446 = vmatprep.subr.mxu0 0.0
    %447 = vmatpush1.xpose.msra.mxu0 %v441
    %448 = vmatprep.subr.mxu0 0.0
    %449 = vmatpush1.xpose.msra.mxu0 %v444
    %450 = vmatprep.subr.mxu0 0.0
    %451 = vmatpush1.xpose.msra.mxu0 0.0
    %452 = vmatprep.subr.mxu0 0.0
    %453 = vmatpush1.xpose.msra.mxu0 0.0
    %454 = vmatprep.subr.mxu0 0.0
    %455 = vmatpush1.xpose.msra.mxu0 0.0
    %456 = vmatprep.subr.mxu0 0.0
    %457 = vmatpush1.xpose.msra.mxu0 0.0
    %458 = vmatprep.subr.mxu0 0.0
    %459 = vmatpush1.xpose.msra.mxu0 0.0
    %460 = vmatprep.subr.mxu0 0.0
    %461 = vmatpush1.xpose.msra.mxu0 0.0
    %462 = vmatprep.subr.mxu0 0.0
    %463 = vmatpush1.xpose.msra.mxu0 0.0
    %464 = vmatprep.subr.mxu0 0.0
    %465 = vmatpush1.xpose.msra.mxu0 0.0
    %466 = vmatprep.subr.mxu0 0.0
    %467 = vmatpush1.xpose.msra.mxu0 0.0
    %468 = vmatprep.subr.mxu0 0.0
    %469 = vmatpush1.xpose.msra.mxu0 0.0
    %470 = vmatprep.subr.mxu0 0.0
    %471 = vmatpush1.xpose.msra.mxu0 0.0
    %472 = vmatprep.subr.mxu0 0.0
    %473 = vmatpush1.xpose.msra.mxu0 0.0
    %474 = vmatprep.subr.mxu0 0.0
    %475 = vmatpush1.xpose.msra.mxu0 0.0
    %476 = vmatprep.subr.mxu0 0.0
    %477 = vmatpush1.xpose.msra.mxu0 0.0
    %478 = vmatprep.subr.mxu0 0.0
    %479 = vmatpush1.xpose.msra.mxu0 0.0
    %480 = vmatprep.subr.mxu0 0.0
    %481 = vmatpush1.xpose.msra.mxu0 0.0
    %482 = vmatprep.subr.mxu0 0.0
    %483 = vmatpush1.xpose.msra.mxu0 0.0
    %484 = vmatprep.subr.mxu0 0.0
    %485 = vmatpush1.xpose.msra.mxu0 0.0
    %486 = vmatprep.subr.mxu0 0.0
    %487 = vmatpush1.xpose.msra.mxu0 0.0
    %488 = vmatprep.subr.mxu0 0.0
    %489 = vmatpush1.xpose.msra.mxu0 0.0
    %490 = vmatprep.subr.mxu0 0.0
    %491 = vmatpush1.xpose.msra.mxu0 0.0
    %492 = vmatprep.subr.mxu0 0.0
    %493 = vmatpush1.xpose.msra.mxu0 0.0
    %494 = vmatprep.subr.mxu0 0.0
    %495 = vmatpush1.xpose.msra.mxu0 0.0
    %496 = vmatprep.subr.mxu0 0.0
    %497 = vmatpush1.xpose.msra.mxu0 0.0
    %498 = vmatprep.subr.mxu0 0.0
    %499 = vmatpush1.xpose.msra.mxu0 0.0
    %500 = vmatprep.subr.mxu0 0.0
    %501 = vmatpush1.xpose.msra.mxu0 0.0
    %502 = vmatprep.subr.mxu0 0.0
    %503 = vmatpush1.xpose.msra.mxu0 0.0
    %504 = vmatprep.subr.mxu0 0.0
    %505 = vmatpush1.xpose.msra.mxu0 0.0
    %506 = vmatprep.subr.mxu0 0.0
    %507 = vmatpush1.xpose.msra.mxu0 0.0
    %508 = vmatprep.subr.mxu0 0.0
    %509 = vmatpush1.xpose.msra.mxu0 0.0
    %510 = vmatprep.mubr.f32.mxu0 0.0
    %511 = vmatmul.mubr.f32.gmra.mrb[0].mxu0 %v160
    %v512 = vpop.f32.mrb[0].mxu0
    %v513 = vadd.f32 0.0, %v512
    %v514 = vpop.f32.mrb[0].mxu0
    %515 = vdwg.mxu0
    %v516 = vmax.f32 %v434, 1e-16
    %v517 = vmax.f32 %v437, 1e-16
    %v518 = vrsqrt.pop %v516
    %v519 = vrsqrt.pop %v517
    %v520 = vmax.f32 %v513, 1e-16
    %v521 = vrsqrt.pop %v520
    %v522 = vmul.f32 %v244, %v518
    %v523 = vmul.f32 %v244, %v519
    %v524 = vmul.f32 %v420, %v522
    %v525 = vmul.f32 %v423, %v523
    %v526 = vlaneseq
    %v527 = vshrl.u32 %v526, 7
    %v528 = vsub.s32 0, %v527
    %v529 = vrot.slane %v521, %v528
    %v530 = vmul.f32 %v524, %v529
    %v531 = vmul.f32 %v525, %v529
    %s532 = ssub.s32 %s355, 1
    %v533 = vstv %s532
    %vm534 = vcmp.lt.s32.totalorder %v71, %v533
    %vm535 = vcmp.lt.s32.totalorder %v72, %v533
    %vm536 = vmand %vm255, %vm534
    %vm537 = vmand %vm256, %vm535
    %s538 = ssub.s32 %s356, 1
    %v539 = vstv %s538
    %vm540 = vcmp.lt.s32.totalorder %v74, %v539
    %vm541 = vmand %vm263, %vm540
    %v542 = vsel %vm536, 1, 0
    %v543 = vsel %vm537, 1, 0
    %vm544 = vcmp.eq.s32.totalorder %v542, 1
    %vm545 = vcmp.eq.s32.totalorder %v543, 1
    %v546 = vsel %vm541, 1, 0
    %vm547 = vcmp.eq.s32.totalorder %v546, 1
    %vm548 = vmand %vm544, %vm547
    %vm549 = vmand %vm545, %vm547
    %v550 = vsel %vm548, %v530, -1e+30
    %v551 = vsel %vm549, %v531, -1e+30
    %p552 = scmp.ge.s32.totalorder %s359, %s362
    // Predicated region
    $region34: #{tpu_custom_call.1} parent=1 // pred_check
      %p553 = pneg %p552
    $region35: #{tpu_custom_call.1} parent=1 // pred_check_branch
      %555 = sbr.rel (%p553) target = $region37
    $region36: #{tpu_custom_call.1} parent=1 // pred_region
      %vm556 = vcmask 130048
      %v557 = vsel %vm556, %v550, -inf
      %v558 = vsel %vm556, %v551, -inf
      %v559 = vmax.f32 %v557, %v558
      %v560 = vrot.slane %v559, 4
      %v561 = vmax.f32 %v559, %v560
      %v562 = vrot.slane %v561, 2
      %v563 = vmax.f32 %v561, %v562
      %v564 = vrot.slane %v563, 1
      %v565 = vmax.f32 %v563, %v564
      %v566 = vstv %s68
      %v567 = vadd.f32 %v565, %v566
      %v568 = vtanh.pop %v567
      %v569 = vsel %vm541, %v568, 0.0
      %vm570 = vcmask 122880
      %v571 = vsel %vm570, %v569, 0.0
      %572 = vadd.xlane.f32.xlu0 %v571
      %v573 = vpop.xlane.xlu0 %572
      %v574 = vrot.slane %v573, 4
      %v575 = vadd.f32 %v573, %v574
      %v576 = vrot.slane %v575, 2
      %v577 = vadd.f32 %v575, %v576
      %v578 = vrot.slane %v577, 1
      %v579 = vadd.f32 %v577, %v578
      %s580 = vtos %v579
      %s581 = scvt.s32.f32 %s362
      %s582 = smax.f32 %s581, 1.0
      %v583 = vstv %s582
      %v584 = vrcp.pop %v583
      %s585 = vtos %v584
      %s586 = smul.f32 %s580, %s585
    $region37: #{tpu_custom_call.1} parent=1 // pred_fallthru
      %s587 = sphi 0, %s586
    %p588 = pneg %p552
    // Predicated region
    $region38: #{tpu_custom_call.1} parent=1 // pred_check
      _
    $region39: #{tpu_custom_call.1} parent=1 // pred_check_branch
      %590 = sbr.rel (%p552) target = $region41
    $region40: #{tpu_custom_call.1} parent=1 // pred_region
      %vm591 = vcmask 130048
      %v592 = vsel %vm591, %v550, -inf
      %593 = vmax.xlane.f32.xlu0 %v592
      %v594 = vpop.xlane.xlu0 %593
      %v595 = vsel %vm591, %v551, -inf
      %596 = vmax.xlane.f32.xlu0 %v595
      %v597 = vpop.xlane.xlu0 %596
      %v598 = vstv %s68
      %v599 = vadd.f32 %v594, %v598
      %v600 = vadd.f32 %v597, %v598
      %v601 = vtanh.pop %v599
      %v602 = vtanh.pop %v600
      %v603 = vsel %vm536, %v601, 0.0
      %v604 = vsel %vm537, %v602, 0.0
      %vm605 = vcmask 7168
      %v606 = vsel %vm605, %v603, 0.0
      %v607 = vsel %vm605, %v604, 0.0
      %v608 = vadd.f32 %v606, %v607
      %609 = vadd.xlane.f32.xlu0 %v608
      %v610 = vpop.xlane.xlu0 %609
      %v611 = vrot.slane %v610, 4
      %v612 = vadd.f32 %v610, %v611
      %v613 = vrot.slane %v612, 2
      %v614 = vadd.f32 %v612, %v613
      %v615 = vrot.slane %v614, 1
      %v616 = vadd.f32 %v614, %v615
      %s617 = vtos %v616
      %s618 = scvt.s32.f32 %s359
      %s619 = smax.f32 %s618, 1.0
      %v620 = vstv %s619
      %v621 = vrcp.pop %v620
      %s622 = vtos %v621
      %s623 = smul.f32 %s617, %s622
    $region41: #{tpu_custom_call.1} parent=1 // pred_fallthru
      %s624 = sphi %s587, %s623
    %vm625 = vcmp.eq.s32.totalorder %v71, 1
    %v626 = vstv %s624
    %v627 = vsel %vm625, %v626, %v353
    %s628 = sadd.s32 %s69, 2
    %s629 = sld [smem:[#allocation3 + %s628]]
    %s630 = sld [smem:[#allocation4 + %s628]]
    %s631 = ssub.s32 %s629, 2
    %p632 = scmp.gt.s32.totalorder %s631, 0
    %s633 = scalar_select %p632, %s631, 0
    %s634 = ssub.s32 %s630, 2
    %p635 = scmp.gt.s32.totalorder %s634, 0
    %s636 = scalar_select %p635, %s634, 0
    %s637 = scalar_lea.vmem [#allocation9], 16
    %v638 = vld [vmem:[%s637] sm:$0xf]
    %v639 = vld [vmem:[%s637 + $0x4] sm:$0xf]
    %s640 = scalar_lea.vmem [#allocation10], 16
    %v641 = vld [vmem:[%s640] sm:$0xf]
    %v642 = vld [vmem:[%s640 + $0x4] sm:$0xf]
    %v645 = vunpack.c.l.b16 %v638
    %v646 = vunpack.c.l.b16 %v639
    %v647 = vpack.c.b16 %v646, %v645
    %v650 = vunpack.c.l.b16 %v641
    %v651 = vunpack.c.l.b16 %v642
    %v652 = vpack.c.b16 %v651, %v650
    %v654 = vsel %vm97, %v647, 0
    %v657 = vsel %vm97, %v652, 0
    %659 = vmatprep.subr.bf16.mxu0 0
    %660 = vmatpush1.bf16.xpose.msra.mxu0 %v657
    %661 = vmatprep.subr.bf16.mxu0 0
    %662 = vmatpush1.bf16.xpose.msra.mxu0 0
    %663 = vmatprep.subr.bf16.mxu0 0
    %664 = vmatpush1.bf16.xpose.msra.mxu0 0
    %665 = vmatprep.subr.bf16.mxu0 0
    %666 = vmatpush1.bf16.xpose.msra.mxu0 0
    %667 = vmatprep.subr.bf16.mxu0 0
    %668 = vmatpush1.bf16.xpose.msra.mxu0 0
    %669 = vmatprep.subr.bf16.mxu0 0
    %670 = vmatpush1.bf16.xpose.msra.mxu0 0
    %671 = vmatprep.subr.bf16.mxu0 0
    %672 = vmatpush1.bf16.xpose.msra.mxu0 0
    %673 = vmatprep.subr.bf16.mxu0 0
    %674 = vmatpush1.bf16.xpose.msra.mxu0 0
    %675 = vmatprep.subr.bf16.mxu0 0
    %676 = vmatpush1.bf16.xpose.msra.mxu0 0
    %677 = vmatprep.subr.bf16.mxu0 0
    %678 = vmatpush1.bf16.xpose.msra.mxu0 0
    %679 = vmatprep.subr.bf16.mxu0 0
    %680 = vmatpush1.bf16.xpose.msra.mxu0 0
    %681 = vmatprep.subr.bf16.mxu0 0
    %682 = vmatpush1.bf16.xpose.msra.mxu0 0
    %683 = vmatprep.subr.bf16.mxu0 0
    %684 = vmatpush1.bf16.xpose.msra.mxu0 0
    %685 = vmatprep.subr.bf16.mxu0 0
    %686 = vmatpush1.bf16.xpose.msra.mxu0 0
    %687 = vmatprep.subr.bf16.mxu0 0
    %688 = vmatpush1.bf16.xpose.msra.mxu0 0
    %689 = vmatprep.subr.bf16.mxu0 0
    %690 = vmatpush1.bf16.xpose.msra.mxu0 0
    %691 = vmatprep.mubr.bf16.mxu0 0
    %692 = vmatmul.mubr.bf16.gmra.mrb[0].mxu0 %v654
    %v693 = vpop.f32.mrb[0].mxu0
    %v694 = vadd.f32 0.0, %v693
    %v695 = vpop.f32.mrb[0].mxu0
    %v696 = vpop.f32.mrb[0].mxu0
    %v697 = vadd.f32 0.0, %v696
    %v698 = vpop.f32.mrb[0].mxu0
    %699 = vdwg.mxu0
    %v700 = vunpack.c.l.bf16 %v638
    %v701 = vunpack.c.l.bf16 %v639
    %v702 = vunpack.c.l.bf16 %v641
    %v703 = vunpack.c.l.bf16 %v642
    %v704 = vmul.f32 %v700, %v700
    %v705 = vmul.f32 %v701, %v701
    %v706 = vsel %vm97, %v704, 0.0
    %707 = vadd.xlane.f32.xlu0 %v706
    %v708 = vpop.xlane.xlu0 %707
    %v709 = vsel %vm97, %v705, 0.0
    %710 = vadd.xlane.f32.xlu0 %v709
    %v711 = vpop.xlane.xlu0 %710
    %v712 = vmul.f32 %v702, %v702
    %v713 = vmul.f32 %v703, %v703
    %v715 = vsel %vm97, %v712, 0
    %v718 = vsel %vm97, %v713, 0
    %720 = vmatprep.subr.mxu0 0.0
    %721 = vmatpush1.xpose.msra.mxu0 %v715
    %722 = vmatprep.subr.mxu0 0.0
    %723 = vmatpush1.xpose.msra.mxu0 %v718
    %724 = vmatprep.subr.mxu0 0.0
    %725 = vmatpush1.xpose.msra.mxu0 0.0
    %726 = vmatprep.subr.mxu0 0.0
    %727 = vmatpush1.xpose.msra.mxu0 0.0
    %728 = vmatprep.subr.mxu0 0.0
    %729 = vmatpush1.xpose.msra.mxu0 0.0
    %730 = vmatprep.subr.mxu0 0.0
    %731 = vmatpush1.xpose.msra.mxu0 0.0
    %732 = vmatprep.subr.mxu0 0.0
    %733 = vmatpush1.xpose.msra.mxu0 0.0
    %734 = vmatprep.subr.mxu0 0.0
    %735 = vmatpush1.xpose.msra.mxu0 0.0
    %736 = vmatprep.subr.mxu0 0.0
    %737 = vmatpush1.xpose.msra.mxu0 0.0
    %738 = vmatprep.subr.mxu0 0.0
    %739 = vmatpush1.xpose.msra.mxu0 0.0
    %740 = vmatprep.subr.mxu0 0.0
    %741 = vmatpush1.xpose.msra.mxu0 0.0
    %742 = vmatprep.subr.mxu0 0.0
    %743 = vmatpush1.xpose.msra.mxu0 0.0
    %744 = vmatprep.subr.mxu0 0.0
    %745 = vmatpush1.xpose.msra.mxu0 0.0
    %746 = vmatprep.subr.mxu0 0.0
    %747 = vmatpush1.xpose.msra.mxu0 0.0
    %748 = vmatprep.subr.mxu0 0.0
    %749 = vmatpush1.xpose.msra.mxu0 0.0
    %750 = vmatprep.subr.mxu0 0.0
    %751 = vmatpush1.xpose.msra.mxu0 0.0
    %752 = vmatprep.subr.mxu0 0.0
    %753 = vmatpush1.xpose.msra.mxu0 0.0
    %754 = vmatprep.subr.mxu0 0.0
    %755 = vmatpush1.xpose.msra.mxu0 0.0
    %756 = vmatprep.subr.mxu0 0.0
    %757 = vmatpush1.xpose.msra.mxu0 0.0
    %758 = vmatprep.subr.mxu0 0.0
    %759 = vmatpush1.xpose.msra.mxu0 0.0
    %760 = vmatprep.subr.mxu0 0.0
    %761 = vmatpush1.xpose.msra.mxu0 0.0
    %762 = vmatprep.subr.mxu0 0.0
    %763 = vmatpush1.xpose.msra.mxu0 0.0
    %764 = vmatprep.subr.mxu0 0.0
    %765 = vmatpush1.xpose.msra.mxu0 0.0
    %766 = vmatprep.subr.mxu0 0.0
    %767 = vmatpush1.xpose.msra.mxu0 0.0
    %768 = vmatprep.subr.mxu0 0.0
    %769 = vmatpush1.xpose.msra.mxu0 0.0
    %770 = vmatprep.subr.mxu0 0.0
    %771 = vmatpush1.xpose.msra.mxu0 0.0
    %772 = vmatprep.subr.mxu0 0.0
    %773 = vmatpush1.xpose.msra.mxu0 0.0
    %774 = vmatprep.subr.mxu0 0.0
    %775 = vmatpush1.xpose.msra.mxu0 0.0
    %776 = vmatprep.subr.mxu0 0.0
    %777 = vmatpush1.xpose.msra.mxu0 0.0
    %778 = vmatprep.subr.mxu0 0.0
    %779 = vmatpush1.xpose.msra.mxu0 0.0
    %780 = vmatprep.subr.mxu0 0.0
    %781 = vmatpush1.xpose.msra.mxu0 0.0
    %782 = vmatprep.subr.mxu0 0.0
    %783 = vmatpush1.xpose.msra.mxu0 0.0
    %784 = vmatprep.mubr.f32.mxu0 0.0
    %785 = vmatmul.mubr.f32.gmra.mrb[0].mxu0 %v160
    %v786 = vpop.f32.mrb[0].mxu0
    %v787 = vadd.f32 0.0, %v786
    %v788 = vpop.f32.mrb[0].mxu0
    %789 = vdwg.mxu0
    %v790 = vmax.f32 %v708, 1e-16
    %v791 = vmax.f32 %v711, 1e-16
    %v792 = vrsqrt.pop %v790
    %v793 = vrsqrt.pop %v791
    %v794 = vmax.f32 %v787, 1e-16
    %v795 = vrsqrt.pop %v794
    %v796 = vmul.f32 %v244, %v792
    %v797 = vmul.f32 %v244, %v793
    %v798 = vmul.f32 %v694, %v796
    %v799 = vmul.f32 %v697, %v797
    %v800 = vlaneseq
    %v801 = vshrl.u32 %v800, 7
    %v802 = vsub.s32 0, %v801
    %v803 = vrot.slane %v795, %v802
    %v804 = vmul.f32 %v798, %v803
    %v805 = vmul.f32 %v799, %v803
    %s806 = ssub.s32 %s629, 1
    %v807 = vstv %s806
    %vm808 = vcmp.lt.s32.totalorder %v71, %v807
    %vm809 = vcmp.lt.s32.totalorder %v72, %v807
    %vm810 = vmand %vm255, %vm808
    %vm811 = vmand %vm256, %vm809
    %s812 = ssub.s32 %s630, 1
    %v813 = vstv %s812
    %vm814 = vcmp.lt.s32.totalorder %v74, %v813
    %vm815 = vmand %vm263, %vm814
    %v816 = vsel %vm810, 1, 0
    %v817 = vsel %vm811, 1, 0
    %vm818 = vcmp.eq.s32.totalorder %v816, 1
    %vm819 = vcmp.eq.s32.totalorder %v817, 1
    %v820 = vsel %vm815, 1, 0
    %vm821 = vcmp.eq.s32.totalorder %v820, 1
    %vm822 = vmand %vm818, %vm821
    %vm823 = vmand %vm819, %vm821
    %v824 = vsel %vm822, %v804, -1e+30
    %v825 = vsel %vm823, %v805, -1e+30
    %p826 = scmp.ge.s32.totalorder %s633, %s636
    // Predicated region
    $region42: #{tpu_custom_call.1} parent=1 // pred_check
      %p827 = pneg %p826
    $region43: #{tpu_custom_call.1} parent=1 // pred_check_branch
      %829 = sbr.rel (%p827) target = $region45
    $region44: #{tpu_custom_call.1} parent=1 // pred_region
      %vm830 = vcmask 130048
      %v831 = vsel %vm830, %v824, -inf
      %v832 = vsel %vm830, %v825, -inf
      %v833 = vmax.f32 %v831, %v832
      %v834 = vrot.slane %v833, 4
      %v835 = vmax.f32 %v833, %v834
      %v836 = vrot.slane %v835, 2
      %v837 = vmax.f32 %v835, %v836
      %v838 = vrot.slane %v837, 1
      %v839 = vmax.f32 %v837, %v838
      %v840 = vstv %s68
      %v841 = vadd.f32 %v839, %v840
      %v842 = vtanh.pop %v841
      %v843 = vsel %vm815, %v842, 0.0
      %vm844 = vcmask 122880
      %v845 = vsel %vm844, %v843, 0.0
      %846 = vadd.xlane.f32.xlu0 %v845
      %v847 = vpop.xlane.xlu0 %846
      %v848 = vrot.slane %v847, 4
      %v849 = vadd.f32 %v847, %v848
      %v850 = vrot.slane %v849, 2
      %v851 = vadd.f32 %v849, %v850
      %v852 = vrot.slane %v851, 1
      %v853 = vadd.f32 %v851, %v852
      %s854 = vtos %v853
      %s855 = scvt.s32.f32 %s636
      %s856 = smax.f32 %s855, 1.0
      %v857 = vstv %s856
      %v858 = vrcp.pop %v857
      %s859 = vtos %v858
      %s860 = smul.f32 %s854, %s859
    $region45: #{tpu_custom_call.1} parent=1 // pred_fallthru
      %s861 = sphi 0, %s860
    %p862 = pneg %p826
    // Predicated region
    $region46: #{tpu_custom_call.1} parent=1 // pred_check
      _
    $region47: #{tpu_custom_call.1} parent=1 // pred_check_branch
      %864 = sbr.rel (%p826) target = $region49
    $region48: #{tpu_custom_call.1} parent=1 // pred_region
      %vm865 = vcmask 130048
      %v866 = vsel %vm865, %v824, -inf
      %867 = vmax.xlane.f32.xlu0 %v866
      %v868 = vpop.xlane.xlu0 %867
      %v869 = vsel %vm865, %v825, -inf
      %870 = vmax.xlane.f32.xlu0 %v869
      %v871 = vpop.xlane.xlu0 %870
      %v872 = vstv %s68
      %v873 = vadd.f32 %v868, %v872
      %v874 = vadd.f32 %v871, %v872
      %v875 = vtanh.pop %v873
      %v876 = vtanh.pop %v874
      %v877 = vsel %vm810, %v875, 0.0
      %v878 = vsel %vm811, %v876, 0.0
      %vm879 = vcmask 7168
      %v880 = vsel %vm879, %v877, 0.0
      %v881 = vsel %vm879, %v878, 0.0
      %v882 = vadd.f32 %v880, %v881
      %883 = vadd.xlane.f32.xlu0 %v882
      %v884 = vpop.xlane.xlu0 %883
      %v885 = vrot.slane %v884, 4
      %v886 = vadd.f32 %v884, %v885
      %v887 = vrot.slane %v886, 2
      %v888 = vadd.f32 %v886, %v887
      %v889 = vrot.slane %v888, 1
      %v890 = vadd.f32 %v888, %v889
      %s891 = vtos %v890
      %s892 = scvt.s32.f32 %s633
      %s893 = smax.f32 %s892, 1.0
      %v894 = vstv %s893
      %v895 = vrcp.pop %v894
      %s896 = vtos %v895
      %s897 = smul.f32 %s891, %s896
    $region49: #{tpu_custom_call.1} parent=1 // pred_fallthru
      %s898 = sphi %s861, %s897
    %vm899 = vcmp.eq.s32.totalorder %v71, 2
    %v900 = vstv %s898
    %v901 = vsel %vm899, %v900, %v627
    %902 = vst [vmem:[#allocation12] sm:$0x7] %v901
    // Predicated region
    $region50: #{tpu_custom_call.1} parent=1 // pred_check
      _
    $region51: #{tpu_custom_call.1} parent=1 // pred_check_branch
      %904 = sbr.rel (0) target = $region53
    $region52: #{tpu_custom_call.1} parent=1 // pred_region
      %s906 = ssub.s32 64, 64
      %907 = vsyncadd [#allocation7], %s906
      %s909 = sshll.u32 [#allocation12], 4
      %s910 = int_to_ptr.vmem [resolvable:$true] %s909
      %912 = dma.vmem_to_hbm [thread:$0]  %s910, 64, %s5, [#allocation7]
    $region53: #{tpu_custom_call.1} parent=1 // pred_fallthru
      _
    // Predicated region
    $region54: #{tpu_custom_call.1} parent=1 // pred_check
      _
    $region55: #{tpu_custom_call.1} parent=1 // pred_check_branch
      %914 = sbr.rel (0) target = $region57
    $region56: #{tpu_custom_call.1} parent=1 // pred_region
      %915 = dma.done [#allocation7], 64
    $region57: #{tpu_custom_call.1} parent=1 // pred_fallthru
      _
    %916 = vsyncpa [#allocation6], 1
    %917 = vsyncpa [#allocation11], 1
    %918 = vsyncpa [#allocation7], 1
    %919 = vsyncpa [#allocation8], 1

</llo_original>
